<compile_context>
chip_gen: v5e
topology: v5e:2x2
jax: 0.10.0
libtpu: 0.0.40
codegen_flags: <defaults>
</compile_context>

<pallas_src>
import jax
import jax.numpy as jnp
from jax.experimental import pallas as pl
from jax.experimental.pallas import tpu as pltpu


def _round_up(x, m):
    return ((x + m - 1) // m) * m


# ----------------------------- Pallas kernel ---------------------------------

def _fused_head_kernel(x_ref, wp_ref, bp_ref, wd_ref, bd_ref, wf_ref, bf_ref, out_ref):
    """Fused pooler + classification head.

    x_ref  : [T, H]   pre-pooler features (f32, cast to bf16 in-kernel)
    wp_ref : [H, H]   pooler weight, (in, out) layout, bf16
    bp_ref : [1, H]   pooler bias, f32
    wd_ref : [H, H]   dense weight, (in, out) layout, bf16
    bd_ref : [1, H]   dense bias, f32
    wf_ref : [H, Lp]  fc weight, (in, out) layout, zero-padded to Lp lanes, bf16
    bf_ref : [1, Lp]  fc bias, zero-padded, f32
    out_ref: [T, Lp]  sigmoid probabilities, bf16 (lane-dense)
    """
    # Cast activations in-kernel: avoids a separate XLA pad/cast pass over HBM.
    x = x_ref[...].astype(jnp.bfloat16)

    # BERT pooler: dense + tanh   (f32 accumulate on MXU, f32 elementwise)
    p = jnp.dot(x, wp_ref[...], preferred_element_type=jnp.float32) + bp_ref[...]
    p = jnp.tanh(p)

    # head dense + tanh   (dropout p=0.1 is identity in eval mode)
    h = jnp.dot(p.astype(jnp.bfloat16), wd_ref[...],
                preferred_element_type=jnp.float32) + bd_ref[...]
    h = jnp.tanh(h)

    # fc + sigmoid;  sigmoid(x) = 1 / (1 + exp(-x)) with the divide on the
    # approx-reciprocal path (free EUP/VPU slot -> cheap epilogue on v5e too).
    logits = jnp.dot(h.astype(jnp.bfloat16), wf_ref[...],
                     preferred_element_type=jnp.float32) + bf_ref[...]
    probs = pl.reciprocal(1.0 + jnp.exp(-logits), approx=True)
    out_ref[...] = probs.astype(out_ref.dtype)


# ------------------------- parameter preparation ------------------------------

def prepare_params(pooler_w, pooler_b, dense_w, dense_b, fc_w, fc_b):
    """One-time conversion: transpose to (in,out), pad labels to a lane multiple,
    cast matmul operands to bf16. Done at load time, NOT per forward call."""
    H = dense_w.shape[0]
    L = fc_w.shape[0]
    Lp = max(128, _round_up(L, 128))                 # lane-dense label dim

    wp = pooler_w.T.astype(jnp.bfloat16)                             # [H, H]
    bp = pooler_b.reshape(1, H).astype(jnp.float32)
    wd = dense_w.T.astype(jnp.bfloat16)                              # [H, H]
    bd = dense_b.reshape(1, H).astype(jnp.float32)
    wf = jnp.zeros((H, Lp), jnp.bfloat16).at[:, :L].set(fc_w.T.astype(jnp.bfloat16))
    bf = jnp.zeros((1, Lp), jnp.float32).at[:, :L].set(fc_b.astype(jnp.float32))
    return (wp, bp, wd, bd, wf, bf), L


# ----------------------------- kernel wrapper ---------------------------------

def fused_cls_head(pooled, params, *, row_tile=512):
    """pooled: [B, H] f32 pre-pooler features.

    Returns the lane-dense padded [B, Lp] bf16 probability slab (columns >= num_labels
    hold sigmoid(0)=0.5 padding). Slice [:, :num_labels] lazily at the consumer to
    avoid an extra full-output HBM pass on this bandwidth-bound path."""
    wp, bp, wd, bd, wf, bf = params
    B, H = pooled.shape
    Lp = wf.shape[1]

    # Row tile: sublane-aligned, as large as possible (mem-bound kernel), but capped
    # so the parallel grid axis has >=2 steps whenever B allows (v7x 2nd TC / megacore).
    if B <= 8:
        tile = 8
    else:
        tile = min(row_tile, _round_up(pl.cdiv(B, 2), 8))
    grid = (pl.cdiv(B, tile),)                        # ragged final block handled by Pallas

    out = pl.pallas_call(
        _fused_head_kernel,
        out_shape=jax.ShapeDtypeStruct((B, Lp), jnp.bfloat16),
        grid=grid,
        in_specs=[
            pl.BlockSpec((tile, H), lambda i: (i, 0)),   # x: tiled over batch rows (f32)
            pl.BlockSpec((H, H), lambda i: (0, 0)),      # pooler weight (resident)
            pl.BlockSpec((1, H), lambda i: (0, 0)),      # pooler bias
            pl.BlockSpec((H, H), lambda i: (0, 0)),      # dense weight (resident)
            pl.BlockSpec((1, H), lambda i: (0, 0)),      # dense bias
            pl.BlockSpec((H, Lp), lambda i: (0, 0)),     # fc weight (resident)
            pl.BlockSpec((1, Lp), lambda i: (0, 0)),     # fc bias
        ],
        out_specs=pl.BlockSpec((tile, Lp), lambda i: (i, 0)),
        compiler_params=pltpu.CompilerParams(
            dimension_semantics=("parallel",),           # shard rows across TCs
        ),
    )(pooled, wp, bp, wd, bd, wf, bf)

    return out                                           # [B, Lp] bf16 (padded labels)


# ------------------------- plain-JAX glue (stub BERT) --------------------------

def stub_bert_features(input_ids, bert_mask, embed_table):
    """Deterministic stand-in for the bert_model encoder: embedding lookup followed
    by a mask-weighted mean over the sequence. The pooler dense+tanh that would
    normally produce pooler_output is fused into the Pallas kernel."""
    emb = embed_table[input_ids]                                  # [B, S, H]
    mask = bert_mask.astype(jnp.float32)[..., None]               # [B, S, 1]
    pooled = (emb * mask).sum(axis=1) / jnp.maximum(mask.sum(axis=1), 1.0)  # [B, H]
    return pooled


# ----------------------------------- main --------------------------------------

if __name__ == "__main__":
    # Small shapes consistent with the module ("emo8" -> 8 labels).
    B, S, H, L = 2, 8, 128, 8
    VOCAB = 64

    key = jax.random.PRNGKey(0)
    k_ids, k_emb, k_pw, k_pb, k_dw, k_db, k_fw, k_fb = jax.random.split(key, 8)

    input_ids = jax.random.randint(k_ids, (B, S), 0, VOCAB, dtype=jnp.int32)
    bert_mask = jnp.ones((B, S), dtype=jnp.int32)

    # Stub-BERT parameters (deterministic).
    embed_table = jax.random.normal(k_emb, (VOCAB, H), dtype=jnp.float32) * 0.02
    pooler_w = jax.random.normal(k_pw, (H, H), dtype=jnp.float32) * 0.02
    pooler_b = jax.random.normal(k_pb, (H,), dtype=jnp.float32) * 0.02

    # Module parameters, matching __init__ (weight ~ N(0, 0.02), zero bias).
    dense_w = jax.random.normal(k_dw, (H, H), dtype=jnp.float32) * 0.02
    dense_b = jnp.zeros((H,), dtype=jnp.float32)
    fc_w = jax.random.normal(k_fw, (L, H), dtype=jnp.float32) * 0.02
    fc_b = jnp.zeros((L,), dtype=jnp.float32)

    # One-time parameter prep (transpose / pad / bf16 cast outside the hot path).
    params, num_labels = prepare_params(pooler_w, pooler_b, dense_w, dense_b, fc_w, fc_b)

    # Forward: stub encoder (glue) -> fused Pallas pooler + classification head.
    pooled = stub_bert_features(input_ids, bert_mask, embed_table)
    probs_padded = fused_cls_head(pooled, params)        # [B, Lp] bf16
    probs_padded = jax.block_until_ready(probs_padded)
    assert probs_padded.shape == (B, 128)

    # Consumer-side lazy slice to the logical label count (test/check only).
    probs = probs_padded[:, :num_labels].astype(jnp.float32)
    assert probs.shape == (B, L)

    # Reference 1: same bf16-input / f32-accumulate recipe in plain JAX
    # (tolerance covers bf16 output rounding + approx reciprocal).
    wp, bp, wd, bd, wf, bf = params
    xb = pooled.astype(jnp.bfloat16)
    p_ref = jnp.tanh(jnp.dot(xb, wp, preferred_element_type=jnp.float32) + bp)
    h_ref = jnp.tanh(jnp.dot(p_ref.astype(jnp.bfloat16), wd,
                             preferred_element_type=jnp.float32) + bd)
    ref_bf16 = jax.nn.sigmoid(jnp.dot(h_ref.astype(jnp.bfloat16), wf,
                                      preferred_element_type=jnp.float32) + bf)[:, :L]
    assert jnp.allclose(probs, ref_bf16, atol=5e-3, rtol=5e-3)

    # Reference 2: full-f32 module semantics (loose check for bf16 casts).
    pooler_output = jnp.tanh(pooled @ pooler_w.T + pooler_b)
    ref_f32 = jax.nn.sigmoid(jnp.tanh(pooler_output @ dense_w.T + dense_b) @ fc_w.T + fc_b)
    assert jnp.allclose(probs, ref_f32, atol=2e-2, rtol=2e-2)

    print("KERNEL_OK")
</pallas_src>

<mosaic_0001>
module attributes {stable_mosaic.version = 11 : i64} {
  func.func @_fused_head_kernel(%arg0: i32, %arg1: memref<8x128xf32, #tpu.memory_space<vmem>>, %arg2: memref<128x128xbf16, #tpu.memory_space<vmem>>, %arg3: memref<1x128xf32, #tpu.memory_space<vmem>>, %arg4: memref<128x128xbf16, #tpu.memory_space<vmem>>, %arg5: memref<1x128xf32, #tpu.memory_space<vmem>>, %arg6: memref<128x128xbf16, #tpu.memory_space<vmem>>, %arg7: memref<1x128xf32, #tpu.memory_space<vmem>>, %arg8: memref<8x128xbf16, #tpu.memory_space<vmem>>) attributes {dimension_semantics = [#tpu.dimension_semantics<parallel>], iteration_bounds = array<i64: 1>, scalar_prefetch = 0 : i64, scratch_operands = 0 : i64, tpu.core_type = #tpu.core_type<tc>, window_params = [{transform_indices = @transform_0, window_bounds = array<i64: 8, 128>}, {pipeline_mode = #tpu.pipeline_mode<synchronous>, transform_indices = @transform_1, window_bounds = array<i64: 128, 128>}, {pipeline_mode = #tpu.pipeline_mode<synchronous>, transform_indices = @transform_2, window_bounds = array<i64: 1, 128>}, {pipeline_mode = #tpu.pipeline_mode<synchronous>, transform_indices = @transform_3, window_bounds = array<i64: 128, 128>}, {pipeline_mode = #tpu.pipeline_mode<synchronous>, transform_indices = @transform_4, window_bounds = array<i64: 1, 128>}, {pipeline_mode = #tpu.pipeline_mode<synchronous>, transform_indices = @transform_5, window_bounds = array<i64: 128, 128>}, {pipeline_mode = #tpu.pipeline_mode<synchronous>, transform_indices = @transform_6, window_bounds = array<i64: 1, 128>}, {transform_indices = @transform_7, window_bounds = array<i64: 8, 128>}]} {
    %c0 = arith.constant 0 : index
    %c0_0 = arith.constant 0 : index
    %0 = vector.load %arg1[%c0, %c0_0] : memref<8x128xf32, #tpu.memory_space<vmem>>, vector<8x128xf32>
    %1 = arith.truncf %0 : vector<8x128xf32> to vector<8x128xbf16>
    %c0_1 = arith.constant 0 : index
    %c0_2 = arith.constant 0 : index
    %2 = vector.load %arg2[%c0_1, %c0_2] : memref<128x128xbf16, #tpu.memory_space<vmem>>, vector<128x128xbf16>
    %cst = arith.constant dense<0.000000e+00> : vector<8x128xf32>
    %3 = tpu.matmul %1, %2, %cst {dimension_numbers = #tpu.dot_dimension_numbers<[1], [0], [0], [1], [0, 0, 1, 1], [], []>} : vector<8x128xbf16>, vector<128x128xbf16>, vector<8x128xf32> -> vector<8x128xf32>
    %c0_3 = arith.constant 0 : index
    %c0_4 = arith.constant 0 : index
    %4 = vector.load %arg3[%c0_3, %c0_4] : memref<1x128xf32, #tpu.memory_space<vmem>>, vector<1x128xf32>
    %5 = vector.broadcast %4 : vector<1x128xf32> to vector<8x128xf32>
    %6 = arith.addf %3, %5 : vector<8x128xf32>
    %7 = math.tanh %6 : vector<8x128xf32>
    %8 = arith.truncf %7 : vector<8x128xf32> to vector<8x128xbf16>
    %c0_5 = arith.constant 0 : index
    %c0_6 = arith.constant 0 : index
    %9 = vector.load %arg4[%c0_5, %c0_6] : memref<128x128xbf16, #tpu.memory_space<vmem>>, vector<128x128xbf16>
    %cst_7 = arith.constant dense<0.000000e+00> : vector<8x128xf32>
    %10 = tpu.matmul %8, %9, %cst_7 {dimension_numbers = #tpu.dot_dimension_numbers<[1], [0], [0], [1], [0, 0, 1, 1], [], []>} : vector<8x128xbf16>, vector<128x128xbf16>, vector<8x128xf32> -> vector<8x128xf32>
    %c0_8 = arith.constant 0 : index
    %c0_9 = arith.constant 0 : index
    %11 = vector.load %arg5[%c0_8, %c0_9] : memref<1x128xf32, #tpu.memory_space<vmem>>, vector<1x128xf32>
    %12 = vector.broadcast %11 : vector<1x128xf32> to vector<8x128xf32>
    %13 = arith.addf %10, %12 : vector<8x128xf32>
    %14 = math.tanh %13 : vector<8x128xf32>
    %15 = arith.truncf %14 : vector<8x128xf32> to vector<8x128xbf16>
    %c0_10 = arith.constant 0 : index
    %c0_11 = arith.constant 0 : index
    %16 = vector.load %arg6[%c0_10, %c0_11] : memref<128x128xbf16, #tpu.memory_space<vmem>>, vector<128x128xbf16>
    %cst_12 = arith.constant dense<0.000000e+00> : vector<8x128xf32>
    %17 = tpu.matmul %15, %16, %cst_12 {dimension_numbers = #tpu.dot_dimension_numbers<[1], [0], [0], [1], [0, 0, 1, 1], [], []>} : vector<8x128xbf16>, vector<128x128xbf16>, vector<8x128xf32> -> vector<8x128xf32>
    %c0_13 = arith.constant 0 : index
    %c0_14 = arith.constant 0 : index
    %18 = vector.load %arg7[%c0_13, %c0_14] : memref<1x128xf32, #tpu.memory_space<vmem>>, vector<1x128xf32>
    %19 = vector.broadcast %18 : vector<1x128xf32> to vector<8x128xf32>
    %20 = arith.addf %17, %19 : vector<8x128xf32>
    %cst_15 = arith.constant 0.000000e+00 : f32
    %21 = vector.broadcast %cst_15 : f32 to vector<8x128xf32>
    %22 = arith.subf %21, %20 : vector<8x128xf32>
    %23 = math.exp %22 : vector<8x128xf32>
    %cst_16 = arith.constant 1.000000e+00 : f32
    %24 = vector.broadcast %cst_16 : f32 to vector<8x128xf32>
    %25 = arith.addf %24, %23 : vector<8x128xf32>
    %26 = tpu.reciprocal %25 {approx = true} : vector<8x128xf32> -> vector<8x128xf32>
    %27 = arith.truncf %26 : vector<8x128xf32> to vector<8x128xbf16>
    %c0_17 = arith.constant 0 : index
    %c0_18 = arith.constant 0 : index
    %28 = vector.load %arg8[%c0_17, %c0_18] : memref<8x128xbf16, #tpu.memory_space<vmem>>, vector<8x128xbf16>
    tpu.vector_store %arg8[%c0_17, %c0_18], %27 {strides = array<i32>} : memref<8x128xbf16, #tpu.memory_space<vmem>>, vector<8x128xbf16>,
    return
  }
  func.func @transform_0(%arg0: i32) -> (i32, i32) {
    %c0_i32 = arith.constant 0 : i32
    %c0_i32_0 = arith.constant 0 : i32
    return %arg0, %c0_i32 : i32, i32
  }
  func.func @transform_1(%arg0: i32) -> (i32, i32) {
    %c0_i32 = arith.constant 0 : i32
    %c0_i32_0 = arith.constant 0 : i32
    %c0_i32_1 = arith.constant 0 : i32
    return %c0_i32, %c0_i32_0 : i32, i32
  }
  func.func @transform_2(%arg0: i32) -> (i32, i32) {
    %c0_i32 = arith.constant 0 : i32
    %c0_i32_0 = arith.constant 0 : i32
    %c0_i32_1 = arith.constant 0 : i32
    return %c0_i32, %c0_i32_0 : i32, i32
  }
  func.func @transform_3(%arg0: i32) -> (i32, i32) {
    %c0_i32 = arith.constant 0 : i32
    %c0_i32_0 = arith.constant 0 : i32
    %c0_i32_1 = arith.constant 0 : i32
    return %c0_i32, %c0_i32_0 : i32, i32
  }
  func.func @transform_4(%arg0: i32) -> (i32, i32) {
    %c0_i32 = arith.constant 0 : i32
    %c0_i32_0 = arith.constant 0 : i32
    %c0_i32_1 = arith.constant 0 : i32
    return %c0_i32, %c0_i32_0 : i32, i32
  }
  func.func @transform_5(%arg0: i32) -> (i32, i32) {
    %c0_i32 = arith.constant 0 : i32
    %c0_i32_0 = arith.constant 0 : i32
    %c0_i32_1 = arith.constant 0 : i32
    return %c0_i32, %c0_i32_0 : i32, i32
  }
  func.func @transform_6(%arg0: i32) -> (i32, i32) {
    %c0_i32 = arith.constant 0 : i32
    %c0_i32_0 = arith.constant 0 : i32
    %c0_i32_1 = arith.constant 0 : i32
    return %c0_i32, %c0_i32_0 : i32, i32
  }
  func.func @transform_7(%arg0: i32) -> (i32, i32) {
    %c0_i32 = arith.constant 0 : i32
    %c0_i32_0 = arith.constant 0 : i32
    return %arg0, %c0_i32 : i32, i32
  }
}

</mosaic_0001>

<llo_original>
// kernel: tpu_custom_call.1
$region0: #{tpu_custom_call.1}
  #allocation0 [shape = 'u32[]', space=smem, size = 0x4, offset = 0x4, fixed_abs, tag = 'smem constant byte address 0x4 - core index']
  #allocation1 [shape = 'u32[72,128]{1,0:T(1,128)}', space=vmem, size = 0x9000, scoped, tag = 'internal scratch']
  %s0 = inlined_call_operand.hbm [shape: f32[2,128], index: 0, kind: input, shape index: {}]
  %s1 = inlined_call_operand.hbm [shape: bf16[128,128], index: 1, kind: input, shape index: {}]
  %s2 = inlined_call_operand.vmem [shape: f32[1,128], index: 2, kind: input, shape index: {}]
  %s3 = inlined_call_operand.hbm [shape: bf16[128,128], index: 3, kind: input, shape index: {}]
  %s4 = inlined_call_operand.vmem [shape: f32[1,128], index: 4, kind: input, shape index: {}]
  %s5 = inlined_call_operand.hbm [shape: bf16[128,128], index: 5, kind: input, shape index: {}]
  %s6 = inlined_call_operand.vmem [shape: f32[1,128], index: 6, kind: input, shape index: {}]
  %s7 = inlined_call_operand.hbm [shape: bf16[2,128], index: 7, kind: output, shape index: {}]
  %s8 = sld [smem:[#allocation0]]
  $region54: #{tpu_custom_call.1} parent=0
    _
  %s10 = ssub.s32 1, %s8
  %s11 = scalar_select 0, %s10, %s8
  $region1: #{tpu_custom_call.1} parent=0
    #allocation2 [shape = 'u8[4096]{0}', space=vmem, size = 0x1000, scoped, tag = 'input window, operand 0, single buffered']
    #allocation3 [shape = 's32[1]{0}', space=sflag, size = 0x4, scoped, tag = 'scoped memory for tpu_custom_call.1']
    #allocation4 [shape = 's32[1]{0}', space=sflag, size = 0x4, scoped, tag = 'scoped memory for tpu_custom_call.1']
    #allocation5 [shape = 'u8[32768]{0}', space=vmem, size = 0x8000, scoped, tag = 'input window, operand 1, single buffered']
    #allocation6 [shape = 's32[1]{0}', space=sflag, size = 0x4, scoped, tag = 'scoped memory for tpu_custom_call.1']
    #allocation7 [shape = 'u8[32768]{0}', space=vmem, size = 0x8000, scoped, tag = 'input window, operand 3, single buffered']
    #allocation8 [shape = 'u8[32768]{0}', space=vmem, size = 0x8000, scoped, tag = 'input window, operand 5, single buffered']
    #allocation9 [shape = 's32[1]{0}', space=sflag, size = 0x4, scoped, tag = 'scoped memory for tpu_custom_call.1']
    #allocation10 [shape = 'u8[2048]{0}', space=vmem, size = 0x800, scoped, tag = 'output window, operand 0, single buffered']
    %12 = vsyncpa [#allocation3], 0
    %13 = vsyncpa [#allocation6], 0
    %14 = vsyncpa [#allocation9], 0
    %15 = vsyncpa [#allocation4], 0
    // Predicated region
    $region2: #{tpu_custom_call.1} parent=1 // pred_check
      _
    $region3: #{tpu_custom_call.1} parent=1 // pred_check_branch
      %17 = sbr.rel (0) target = $region5
    $region4: #{tpu_custom_call.1} parent=1 // pred_region
      %19 = vsyncadd [#allocation3], 96
      %s20 = sshll.u32 %s0, 4
      %s21 = int_to_ptr.hbm [resolvable:$true] %s20
      %s22 = sshll.u32 [#allocation2], 4
      %s23 = int_to_ptr.vmem [resolvable:$true] %s22
      %28 = dma.hbm_to_vmem [thread:$0]  %s21, 32, %s23, [#allocation3], 32, 32, 2
    $region5: #{tpu_custom_call.1} parent=1 // pred_fallthru
      _
    // Predicated region
    $region6: #{tpu_custom_call.1} parent=1 // pred_check
      _
    $region7: #{tpu_custom_call.1} parent=1 // pred_check_branch
      %30 = sbr.rel (0) target = $region9
    $region8: #{tpu_custom_call.1} parent=1 // pred_region
      %32 = vsyncadd [#allocation6], 0
      %s33 = sshll.u32 %s1, 4
      %s34 = int_to_ptr.hbm [resolvable:$true] %s33
      %s35 = sshll.u32 [#allocation5], 4
      %s36 = int_to_ptr.vmem [resolvable:$true] %s35
      %41 = dma.hbm_to_vmem [thread:$0]  %s34, 1024, %s36, [#allocation6], 64, 64, 4
    $region9: #{tpu_custom_call.1} parent=1 // pred_fallthru
      _
    // Predicated region
    $region10: #{tpu_custom_call.1} parent=1 // pred_check
      _
    $region11: #{tpu_custom_call.1} parent=1 // pred_check_branch
      %43 = sbr.rel (0) target = $region13
    $region12: #{tpu_custom_call.1} parent=1 // pred_region
      _
    $region13: #{tpu_custom_call.1} parent=1 // pred_fallthru
      _
    // Predicated region
    $region14: #{tpu_custom_call.1} parent=1 // pred_check
      _
    $region15: #{tpu_custom_call.1} parent=1 // pred_check_branch
      %45 = sbr.rel (0) target = $region17
    $region16: #{tpu_custom_call.1} parent=1 // pred_region
      %47 = vsyncadd [#allocation6], 0
      %s48 = sshll.u32 %s3, 4
      %s49 = int_to_ptr.hbm [resolvable:$true] %s48
      %s50 = sshll.u32 [#allocation7], 4
      %s51 = int_to_ptr.vmem [resolvable:$true] %s50
      %56 = dma.hbm_to_vmem [thread:$0]  %s49, 1024, %s51, [#allocation6], 64, 64, 4
    $region17: #{tpu_custom_call.1} parent=1 // pred_fallthru
      _
    // Predicated region
    $region18: #{tpu_custom_call.1} parent=1 // pred_check
      _
    $region19: #{tpu_custom_call.1} parent=1 // pred_check_branch
      %58 = sbr.rel (0) target = $region21
    $region20: #{tpu_custom_call.1} parent=1 // pred_region
      _
    $region21: #{tpu_custom_call.1} parent=1 // pred_fallthru
      _
    // Predicated region
    $region22: #{tpu_custom_call.1} parent=1 // pred_check
      _
    $region23: #{tpu_custom_call.1} parent=1 // pred_check_branch
      %60 = sbr.rel (0) target = $region25
    $region24: #{tpu_custom_call.1} parent=1 // pred_region
      %62 = vsyncadd [#allocation9], 0
      %s63 = sshll.u32 %s5, 4
      %s64 = int_to_ptr.hbm [resolvable:$true] %s63
      %s65 = sshll.u32 [#allocation8], 4
      %s66 = int_to_ptr.vmem [resolvable:$true] %s65
      %71 = dma.hbm_to_vmem [thread:$0]  %s64, 1024, %s66, [#allocation9], 64, 64, 4
    $region25: #{tpu_custom_call.1} parent=1 // pred_fallthru
      _
    // Predicated region
    $region26: #{tpu_custom_call.1} parent=1 // pred_check
      _
    $region27: #{tpu_custom_call.1} parent=1 // pred_check_branch
      %73 = sbr.rel (0) target = $region29
    $region28: #{tpu_custom_call.1} parent=1 // pred_region
      _
    $region29: #{tpu_custom_call.1} parent=1 // pred_fallthru
      _
    // Predicated region
    $region30: #{tpu_custom_call.1} parent=1 // pred_check
      _
    $region31: #{tpu_custom_call.1} parent=1 // pred_check_branch
      %75 = sbr.rel (0) target = $region33
    $region32: #{tpu_custom_call.1} parent=1 // pred_region
      %77 = dma.done [#allocation3], 128
    $region33: #{tpu_custom_call.1} parent=1 // pred_fallthru
      _
    // Predicated region
    $region34: #{tpu_custom_call.1} parent=1 // pred_check
      _
    $region35: #{tpu_custom_call.1} parent=1 // pred_check_branch
      %79 = sbr.rel (0) target = $region37
    $region36: #{tpu_custom_call.1} parent=1 // pred_region
      %81 = dma.done [#allocation6], 1024
    $region37: #{tpu_custom_call.1} parent=1 // pred_fallthru
      _
    // Predicated region
    $region38: #{tpu_custom_call.1} parent=1 // pred_check
      _
    $region39: #{tpu_custom_call.1} parent=1 // pred_check_branch
      %83 = sbr.rel (0) target = $region41
    $region40: #{tpu_custom_call.1} parent=1 // pred_region
      %85 = dma.done [#allocation6], 1024
    $region41: #{tpu_custom_call.1} parent=1 // pred_fallthru
      _
    // Predicated region
    $region42: #{tpu_custom_call.1} parent=1 // pred_check
      _
    $region43: #{tpu_custom_call.1} parent=1 // pred_check_branch
      %87 = sbr.rel (0) target = $region45
    $region44: #{tpu_custom_call.1} parent=1 // pred_region
      %89 = dma.done [#allocation9], 1024
    $region45: #{tpu_custom_call.1} parent=1 // pred_fallthru
      _
    %v90 = vld [vmem:[#allocation2] sm:$0xff]
    %v91 = vpack.c.bf16 %v90, %v90
    %v92 = vld [vmem:[#allocation5] sm:$0xf]
    %v93 = vld [vmem:[#allocation5 + $0x4] sm:$0xf]
    %v94 = vld [vmem:[#allocation5 + $0x8] sm:$0xf]
    %v95 = vld [vmem:[#allocation5 + $0xc] sm:$0xf]
    %v96 = vld [vmem:[#allocation5 + $0x10] sm:$0xf]
    %v97 = vld [vmem:[#allocation5 + $0x14] sm:$0xf]
    %v98 = vld [vmem:[#allocation5 + $0x18] sm:$0xf]
    %v99 = vld [vmem:[#allocation5 + $0x1c] sm:$0xf]
    %v100 = vld [vmem:[#allocation5 + $0x20] sm:$0xf]
    %v101 = vld [vmem:[#allocation5 + $0x24] sm:$0xf]
    %v102 = vld [vmem:[#allocation5 + $0x28] sm:$0xf]
    %v103 = vld [vmem:[#allocation5 + $0x2c] sm:$0xf]
    %v104 = vld [vmem:[#allocation5 + $0x30] sm:$0xf]
    %v105 = vld [vmem:[#allocation5 + $0x34] sm:$0xf]
    %v106 = vld [vmem:[#allocation5 + $0x38] sm:$0xf]
    %v107 = vld [vmem:[#allocation5 + $0x3c] sm:$0xf]
    %v108 = vld [vmem:[%s2] sm:$0x1]
    %v110 = vperm.slane %v108, 0
    %v128 = vunpack.c.l.b16 %v92
    %v129 = vunpack.c.l.b16 %v93
    %v130 = vunpack.c.l.b16 %v94
    %v131 = vunpack.c.l.b16 %v95
    %v132 = vunpack.c.l.b16 %v96
    %v133 = vunpack.c.l.b16 %v97
    %v134 = vunpack.c.l.b16 %v98
    %v135 = vunpack.c.l.b16 %v99
    %v136 = vunpack.c.l.b16 %v100
    %v137 = vunpack.c.l.b16 %v101
    %v138 = vunpack.c.l.b16 %v102
    %v139 = vunpack.c.l.b16 %v103
    %v140 = vunpack.c.l.b16 %v104
    %v141 = vunpack.c.l.b16 %v105
    %v142 = vunpack.c.l.b16 %v106
    %v143 = vunpack.c.l.b16 %v107
    %v144 = vpack.c.b16 %v129, %v128
    %v145 = vpack.c.b16 %v131, %v130
    %v146 = vpack.c.b16 %v133, %v132
    %v147 = vpack.c.b16 %v135, %v134
    %v148 = vpack.c.b16 %v137, %v136
    %v149 = vpack.c.b16 %v139, %v138
    %v150 = vpack.c.b16 %v141, %v140
    %v151 = vpack.c.b16 %v143, %v142
    %160 = vmatpush.bf16.msra.mxu0 %v151
    %161 = vmatpush.bf16.msra.mxu0 %v150
    %162 = vmatpush.bf16.msra.mxu0 %v149
    %163 = vmatpush.bf16.msra.mxu0 %v148
    %164 = vmatpush.bf16.msra.mxu0 %v147
    %165 = vmatpush.bf16.msra.mxu0 %v146
    %166 = vmatpush.bf16.msra.mxu0 %v145
    %167 = vmatpush.bf16.msra.mxu0 %v144
    %168 = vmatmul.bf16.gmra.mxu0 %v91
    %v169 = vpop.f32.mrf.mxu0
    %v170 = vadd.f32 %v110, %v169
    %v171 = vpop.f32.mrf.mxu0
    %172 = vdwg.mxu0
    %v173 = vtanh.pop %v170
    %v174 = vpack.c.bf16 %v173, %v173
    %v175 = vld [vmem:[#allocation7] sm:$0xf]
    %v176 = vld [vmem:[#allocation7 + $0x4] sm:$0xf]
    %v177 = vld [vmem:[#allocation7 + $0x8] sm:$0xf]
    %v178 = vld [vmem:[#allocation7 + $0xc] sm:$0xf]
    %v179 = vld [vmem:[#allocation7 + $0x10] sm:$0xf]
    %v180 = vld [vmem:[#allocation7 + $0x14] sm:$0xf]
    %v181 = vld [vmem:[#allocation7 + $0x18] sm:$0xf]
    %v182 = vld [vmem:[#allocation7 + $0x1c] sm:$0xf]
    %v183 = vld [vmem:[#allocation7 + $0x20] sm:$0xf]
    %v184 = vld [vmem:[#allocation7 + $0x24] sm:$0xf]
    %v185 = vld [vmem:[#allocation7 + $0x28] sm:$0xf]
    %v186 = vld [vmem:[#allocation7 + $0x2c] sm:$0xf]
    %v187 = vld [vmem:[#allocation7 + $0x30] sm:$0xf]
    %v188 = vld [vmem:[#allocation7 + $0x34] sm:$0xf]
    %v189 = vld [vmem:[#allocation7 + $0x38] sm:$0xf]
    %v190 = vld [vmem:[#allocation7 + $0x3c] sm:$0xf]
    %v191 = vld [vmem:[%s4] sm:$0x1]
    %v193 = vperm.slane %v191, 0
    %v211 = vunpack.c.l.b16 %v175
    %v212 = vunpack.c.l.b16 %v176
    %v213 = vunpack.c.l.b16 %v177
    %v214 = vunpack.c.l.b16 %v178
    %v215 = vunpack.c.l.b16 %v179
    %v216 = vunpack.c.l.b16 %v180
    %v217 = vunpack.c.l.b16 %v181
    %v218 = vunpack.c.l.b16 %v182
    %v219 = vunpack.c.l.b16 %v183
    %v220 = vunpack.c.l.b16 %v184
    %v221 = vunpack.c.l.b16 %v185
    %v222 = vunpack.c.l.b16 %v186
    %v223 = vunpack.c.l.b16 %v187
    %v224 = vunpack.c.l.b16 %v188
    %v225 = vunpack.c.l.b16 %v189
    %v226 = vunpack.c.l.b16 %v190
    %v227 = vpack.c.b16 %v212, %v211
    %v228 = vpack.c.b16 %v214, %v213
    %v229 = vpack.c.b16 %v216, %v215
    %v230 = vpack.c.b16 %v218, %v217
    %v231 = vpack.c.b16 %v220, %v219
    %v232 = vpack.c.b16 %v222, %v221
    %v233 = vpack.c.b16 %v224, %v223
    %v234 = vpack.c.b16 %v226, %v225
    %243 = vmatpush.bf16.msra.mxu0 %v234
    %244 = vmatpush.bf16.msra.mxu0 %v233
    %245 = vmatpush.bf16.msra.mxu0 %v232
    %246 = vmatpush.bf16.msra.mxu0 %v231
    %247 = vmatpush.bf16.msra.mxu0 %v230
    %248 = vmatpush.bf16.msra.mxu0 %v229
    %249 = vmatpush.bf16.msra.mxu0 %v228
    %250 = vmatpush.bf16.msra.mxu0 %v227
    %251 = vmatmul.bf16.gmra.mxu0 %v174
    %v252 = vpop.f32.mrf.mxu0
    %v253 = vadd.f32 %v193, %v252
    %v254 = vpop.f32.mrf.mxu0
    %255 = vdwg.mxu0
    %v256 = vtanh.pop %v253
    %v257 = vpack.c.bf16 %v256, %v256
    %v258 = vld [vmem:[#allocation8] sm:$0xf]
    %v259 = vld [vmem:[#allocation8 + $0x4] sm:$0xf]
    %v260 = vld [vmem:[#allocation8 + $0x8] sm:$0xf]
    %v261 = vld [vmem:[#allocation8 + $0xc] sm:$0xf]
    %v262 = vld [vmem:[#allocation8 + $0x10] sm:$0xf]
    %v263 = vld [vmem:[#allocation8 + $0x14] sm:$0xf]
    %v264 = vld [vmem:[#allocation8 + $0x18] sm:$0xf]
    %v265 = vld [vmem:[#allocation8 + $0x1c] sm:$0xf]
    %v266 = vld [vmem:[#allocation8 + $0x20] sm:$0xf]
    %v267 = vld [vmem:[#allocation8 + $0x24] sm:$0xf]
    %v268 = vld [vmem:[#allocation8 + $0x28] sm:$0xf]
    %v269 = vld [vmem:[#allocation8 + $0x2c] sm:$0xf]
    %v270 = vld [vmem:[#allocation8 + $0x30] sm:$0xf]
    %v271 = vld [vmem:[#allocation8 + $0x34] sm:$0xf]
    %v272 = vld [vmem:[#allocation8 + $0x38] sm:$0xf]
    %v273 = vld [vmem:[#allocation8 + $0x3c] sm:$0xf]
    %v274 = vld [vmem:[%s6] sm:$0x1]
    %v276 = vperm.slane %v274, 0
    %v294 = vunpack.c.l.b16 %v258
    %v295 = vunpack.c.l.b16 %v259
    %v296 = vunpack.c.l.b16 %v260
    %v297 = vunpack.c.l.b16 %v261
    %v298 = vunpack.c.l.b16 %v262
    %v299 = vunpack.c.l.b16 %v263
    %v300 = vunpack.c.l.b16 %v264
    %v301 = vunpack.c.l.b16 %v265
    %v302 = vunpack.c.l.b16 %v266
    %v303 = vunpack.c.l.b16 %v267
    %v304 = vunpack.c.l.b16 %v268
    %v305 = vunpack.c.l.b16 %v269
    %v306 = vunpack.c.l.b16 %v270
    %v307 = vunpack.c.l.b16 %v271
    %v308 = vunpack.c.l.b16 %v272
    %v309 = vunpack.c.l.b16 %v273
    %v310 = vpack.c.b16 %v295, %v294
    %v311 = vpack.c.b16 %v297, %v296
    %v312 = vpack.c.b16 %v299, %v298
    %v313 = vpack.c.b16 %v301, %v300
    %v314 = vpack.c.b16 %v303, %v302
    %v315 = vpack.c.b16 %v305, %v304
    %v316 = vpack.c.b16 %v307, %v306
    %v317 = vpack.c.b16 %v309, %v308
    %326 = vmatpush.bf16.msra.mxu0 %v317
    %327 = vmatpush.bf16.msra.mxu0 %v316
    %328 = vmatpush.bf16.msra.mxu0 %v315
    %329 = vmatpush.bf16.msra.mxu0 %v314
    %330 = vmatpush.bf16.msra.mxu0 %v313
    %331 = vmatpush.bf16.msra.mxu0 %v312
    %332 = vmatpush.bf16.msra.mxu0 %v311
    %333 = vmatpush.bf16.msra.mxu0 %v310
    %334 = vmatmul.bf16.gmra.mxu0 %v257
    %v335 = vpop.f32.mrf.mxu0
    %v336 = vadd.f32 %v276, %v335
    %v337 = vpop.f32.mrf.mxu0
    %338 = vdwg.mxu0
    %v339 = vsub.f32 0.0, %v336
    %v340 = vmul.f32 %v339, 1.442695
    %v341 = vpow.pop %v340
    %v342 = vadd.f32 %v341, 1.0
    %v343 = vrcp.pop %v342
    %v344 = vpack.c.bf16 %v343, %v343
    %v346 = vrot.slane %v344, 3
    %vm347 = vcmask 1040384
    %v350 = vsel %vm347, %v344, %v346
    %vm351 = vcmask 1041409
    %v352 = vsel %vm351, %v344, %v346
    %v354 = vrot.slane %v352, 1
    %vm355 = vcmask 1042434
    %v356 = vsel %vm355, %v344, %v346
    %v358 = vrot.slane %v356, 2
    %vm359 = vcmask 1043459
    %v360 = vsel %vm359, %v344, %v346
    %v362 = vrot.slane %v360, 3
    %367 = vst [vmem:[#allocation10] sm:$0x1] %v350
    %368 = vst [vmem:[#allocation10 + $0x1] sm:$0x1] %v354
    %369 = vst [vmem:[#allocation10 + $0x2] sm:$0x1] %v358
    %370 = vst [vmem:[#allocation10 + $0x3] sm:$0x1] %v362
    // Predicated region
    $region46: #{tpu_custom_call.1} parent=1 // pred_check
      _
    $region47: #{tpu_custom_call.1} parent=1 // pred_check_branch
      %372 = sbr.rel (0) target = $region49
    $region48: #{tpu_custom_call.1} parent=1 // pred_region
      %374 = vsyncadd [#allocation4], 48
      %s375 = sshll.u32 [#allocation10], 4
      %s376 = int_to_ptr.vmem [resolvable:$true] %s375
      %s377 = sshll.u32 %s7, 4
      %s378 = int_to_ptr.hbm [resolvable:$true] %s377
      %383 = dma.vmem_to_hbm [thread:$0]  %s376, 16, %s378, [#allocation4], 16, 16, 1
    $region49: #{tpu_custom_call.1} parent=1 // pred_fallthru
      _
    // Predicated region
    $region50: #{tpu_custom_call.1} parent=1 // pred_check
      _
    $region51: #{tpu_custom_call.1} parent=1 // pred_check_branch
      %385 = sbr.rel (0) target = $region53
    $region52: #{tpu_custom_call.1} parent=1 // pred_region
      %387 = dma.done [#allocation4], 64
    $region53: #{tpu_custom_call.1} parent=1 // pred_fallthru
      _
    %388 = vsyncpa [#allocation3], 1
    %389 = vsyncpa [#allocation6], 1
    %390 = vsyncpa [#allocation9], 1
    %391 = vsyncpa [#allocation4], 1

</llo_original>
